<compile_context>
chip_gen: v7x
topology: tpu7x:2x2x1
jax: 0.10.0
libtpu: 0.0.40
codegen_flags: <defaults>
</compile_context>

<pallas_src>
import jax
import jax.numpy as jnp
from jax.experimental import pallas as pl
from jax.experimental.pallas import tpu as pltpu

IGNORE_INDEX = -100


def _round_up(x, m):
    return ((x + m - 1) // m) * m


def _make_ce_partial_kernel(block_n, chunk, c, ignore_index):
    """Kernel emitting one (8,128) partial per block: [0,0]=loss sum, [1,0]=count."""
    n_chunks = block_n // chunk
    assert n_chunks * chunk == block_n

    def kernel(logits_ref, target_ref, out_ref):
        # Hoisted constants (JAX does not CSE broadcasts inside loop bodies).
        col = jax.lax.broadcasted_iota(jnp.int32, (chunk, c), 1)
        ones = jnp.ones((c, 1), jnp.float32)
        sub = jax.lax.broadcasted_iota(jnp.int32, (8, 128), 0)

        def chunk_partial(r0):
            x = logits_ref[pl.ds(r0, chunk), :].astype(jnp.float32)   # (chunk, C)
            t = target_ref[pl.ds(r0, chunk), :]                       # (chunk, 1)
            m = jnp.max(x, axis=-1, keepdims=True)                    # XLU
            e = jnp.exp(x - m)                                        # VPU/EUP
            # Lane reductions offloaded to the (otherwise idle) MXU.
            sum_e = jnp.dot(e, ones, preferred_element_type=jnp.float32)
            lse = jnp.log(sum_e) + m                                  # (chunk, 1)
            picked = jnp.dot(jnp.where(col == t, x, 0.0), ones,
                             preferred_element_type=jnp.float32)      # (chunk, 1)
            valid = t != ignore_index
            loss_col = jnp.where(valid, lse - picked, 0.0)
            cnt_col = jnp.where(valid, 1.0, 0.0)
            c_sum = jnp.sum(loss_col)
            c_cnt = jnp.sum(cnt_col)
            # Pack (sum, count) into one lane-dense (8,128) slab:
            # sublane 0 = loss sum, sublane 1 = valid count.
            return jnp.where(sub == 0, c_sum, jnp.where(sub == 1, c_cnt, 0.0))

        if n_chunks == 1:
            out_ref[0] = chunk_partial(0)
        else:
            out_ref[0] = jnp.zeros((8, 128), jnp.float32)

            @pl.loop(0, n_chunks, unroll=(n_chunks <= 8))
            def _(ci):
                r0 = pl.multiple_of(ci * chunk, chunk)
                out_ref[0] += chunk_partial(r0)

    return kernel


def _pick_tiles(n, c, itemsize, block_n, chunk_rows):
    """Pick (block_n, chunk) from device VMEM, batch size and logits dtype."""
    try:
        vmem_cap = int(pltpu.get_tpu_info().vmem_capacity_bytes)
    except Exception:  # pragma: no cover - conservative fallback (v7x per-TC)
        vmem_cap = 64 * 1024 * 1024

    sub_mult = max(8, 32 // max(1, itemsize))      # f32 -> 8, bf16 -> 16, int8 -> 32
    n_pad = _round_up(max(int(n), 1), sub_mult)

    if block_n is None:
        # True per-row cost of the double-buffered input stream: logits in their
        # native dtype plus the lane-padded (rows,1) int32 target tile (128 lanes).
        per_row = 2 * c * itemsize + 2 * 128 * 4
        budget = min(vmem_cap // 4, 16 * 1024 * 1024)     # ~4-8 MiB logits / block
        rows = max(sub_mult, budget // per_row)
        rows = min(rows, 16384)
        # v7x megacore: keep at least 2 grid blocks whenever the batch allows it.
        rows = min(rows, _round_up(pl.cdiv(int(n), 2), sub_mult))
        block_n = rows

    block_n = max(sub_mult, (int(block_n) // sub_mult) * sub_mult)
    block_n = min(block_n, n_pad)

    chunk = max(sub_mult, (int(chunk_rows) // sub_mult) * sub_mult)
    if block_n <= chunk:
        chunk = block_n                 # small blocks: single compute chunk
    else:
        block_n = (block_n // chunk) * chunk   # compute tile divides DMA tile

    return block_n, chunk, vmem_cap


def cross_entropy_loss_act(logits, target, *, ignore_index=IGNORE_INDEX,
                           block_n=None, chunk_rows=256):
    """logits: (N, C) float32/bfloat16; target: (N,) int.  Returns scalar f32."""
    n, c = logits.shape
    itemsize = jnp.dtype(logits.dtype).itemsize
    block_n, chunk, vmem_cap = _pick_tiles(n, c, itemsize, block_n, chunk_rows)

    nb = pl.cdiv(n, block_n)
    padded_n = nb * block_n

    # Pad targets host-side with ignore_index: removes the in-kernel row-bounds
    # mask and neutralizes the undefined logits rows of the last partial block.
    tgt = target.astype(jnp.int32).reshape(n)
    if padded_n != n:
        tgt = jnp.pad(tgt, (0, padded_n - n), constant_values=ignore_index)
    target2d = tgt.reshape(padded_n, 1)

    # Honest scoped-VMEM accounting (double-buffered tiles + chunked temporaries).
    needed = (2 * block_n * c * itemsize        # logits tiles (x2 buffers)
              + 2 * block_n * 128 * 4           # lane-padded int32 target tiles
              + 2 * 8 * 128 * 4                 # (8,128) partial-output tiles
              + 6 * chunk * c * 4               # f32 chunk temporaries (x, e, mask, ..)
              + 4 * chunk * 128 * 4)            # (chunk,1) column temporaries
    vmem_limit = int(min(max(needed + (4 << 20), 32 << 20), (vmem_cap * 3) // 4))

    kernel = _make_ce_partial_kernel(block_n, chunk, c, ignore_index)

    partials = pl.pallas_call(
        kernel,
        out_shape=jax.ShapeDtypeStruct((nb, 8, 128), jnp.float32),
        grid_spec=pltpu.PrefetchScalarGridSpec(
            num_scalar_prefetch=0,
            grid=(nb,),
            in_specs=[
                pl.BlockSpec((block_n, c), lambda i: (i, 0)),
                pl.BlockSpec((block_n, 1), lambda i: (i, 0)),
            ],
            out_specs=pl.BlockSpec((1, 8, 128), lambda i: (i, 0, 0)),
        ),
        compiler_params=pltpu.CompilerParams(
            dimension_semantics=("parallel",),
            vmem_limit_bytes=vmem_limit,
        ),
    )(logits, target2d)

    # Tiny final reduction (nb elements) + activation in plain JAX.
    total = jnp.sum(partials[:, 0, 0])
    count = jnp.sum(partials[:, 1, 0])
    mean_loss = total / jnp.maximum(count, 1.0)
    # Overflow-safe log(exp(m) - 1.9): NaN for m < log(1.9), -inf at equality,
    # matching torch.log(torch.exp(m) - 1.9).  All-ignored batch -> NaN (as torch).
    return mean_loss + jnp.log1p(-1.9 * jnp.exp(-mean_loss))


def _reference(logits, target, ignore_index=IGNORE_INDEX):
    x = logits.astype(jnp.float32)
    logp = jax.nn.log_softmax(x, axis=1)
    valid = target != ignore_index
    safe_t = jnp.where(valid, target, 0)
    picked = jnp.take_along_axis(logp, safe_t[:, None], axis=1)[:, 0]
    loss = jnp.where(valid, -picked, 0.0)
    mean = jnp.sum(loss) / jnp.maximum(jnp.sum(valid.astype(jnp.float32)), 1.0)
    return jnp.log(jnp.exp(mean) - 1.9)


if __name__ == "__main__":
    key = jax.random.PRNGKey(0)
    k1, k2, k3, k4 = jax.random.split(key, 4)

    # --- Small classification-shaped problem: non-multiple-of-8 batch with an
    #     ignored sample (exercises padded-tail masking). ---
    N, C = 13, 128
    logits = jax.random.normal(k1, (N, C), dtype=jnp.float32)
    target = jax.random.randint(k2, (N,), 0, C, dtype=jnp.int32)
    target = target.at[3].set(IGNORE_INDEX)
    ref = _reference(logits, target)

    # 1) auto tile selection
    out = jax.block_until_ready(cross_entropy_loss_act(logits, target))
    assert jnp.allclose(out, ref, atol=1e-4, rtol=1e-4), (out, ref)

    # 2) forced tiny tile -> multi-block "parallel" grid + masked padded tail
    out2 = jax.block_until_ready(cross_entropy_loss_act(logits, target, block_n=8))
    assert jnp.allclose(out2, ref, atol=1e-4, rtol=1e-4), (out2, ref)

    # 3) bf16 logits over HBM (f32 math inside the kernel)
    logits_bf16 = logits.astype(jnp.bfloat16)
    ref_bf16 = _reference(logits_bf16, target)
    out3 = jax.block_until_ready(cross_entropy_loss_act(logits_bf16, target))
    assert jnp.allclose(out3, ref_bf16, atol=1e-3, rtol=1e-3), (out3, ref_bf16)

    # --- Larger batch: exercises the chunked (pl.loop) compute path. ---
    N2 = 1024
    logits2 = jax.random.normal(k3, (N2, C), dtype=jnp.float32)
    target2 = jax.random.randint(k4, (N2,), 0, C, dtype=jnp.int32)
    target2 = target2.at[0].set(IGNORE_INDEX).at[777].set(IGNORE_INDEX)
    ref2 = _reference(logits2, target2)

    # 4) auto: block_n=512 (2 blocks), chunk=256 (2 chunks per block)
    out4 = jax.block_until_ready(cross_entropy_loss_act(logits2, target2))
    assert jnp.allclose(out4, ref2, atol=1e-4, rtol=1e-4), (out4, ref2)

    # 5) explicit DMA/compute split: block_n=512, chunk=128 -> 4 chunks per block
    out5 = jax.block_until_ready(
        cross_entropy_loss_act(logits2, target2, block_n=512, chunk_rows=128))
    assert jnp.allclose(out5, ref2, atol=1e-4, rtol=1e-4), (out5, ref2)

    print("KERNEL_OK")
</pallas_src>

<mosaic_0001>
module attributes {stable_mosaic.version = 11 : i64} {
  func.func @kernel(%arg0: i32, %arg1: memref<8x128xf32, #tpu.memory_space<vmem>>, %arg2: memref<8x1xi32, #tpu.memory_space<vmem>>, %arg3: memref<1x8x128xf32, #tpu.memory_space<vmem>>) attributes {dimension_semantics = [#tpu.dimension_semantics<parallel>], iteration_bounds = array<i64: 2>, scalar_prefetch = 0 : i64, scratch_operands = 0 : i64, tpu.core_type = #tpu.core_type<tc>, window_params = [{transform_indices = @transform_0, window_bounds = array<i64: 8, 128>}, {transform_indices = @transform_1, window_bounds = array<i64: 8, 1>}, {transform_indices = @transform_2, window_bounds = array<i64: 1, 8, 128>}]} {
    %0 = tpu.iota {dimensions = array<i32: 1>} : vector<8x128xi32>
    %cst = arith.constant 1.000000e+00 : f32
    %1 = vector.broadcast %cst : f32 to vector<128x1xf32>
    %2 = tpu.iota {dimensions = array<i32: 0>} : vector<8x128xi32>
    %c0 = arith.constant 0 : index
    %c0_0 = arith.constant 0 : index
    %3 = vector.load %arg1[%c0, %c0_0] : memref<8x128xf32, #tpu.memory_space<vmem>>, vector<8x128xf32>
    %c0_1 = arith.constant 0 : index
    %c0_2 = arith.constant 0 : index
    %4 = vector.load %arg2[%c0_1, %c0_2] : memref<8x1xi32, #tpu.memory_space<vmem>>, vector<8x1xi32>
    %cst_3 = arith.constant dense<0xFF800000> : vector<8xf32>
    %5 = vector.multi_reduction <maximumf>, %3, %cst_3 [1] : vector<8x128xf32> to vector<8xf32>
    %6 = vector.shape_cast %5 : vector<8xf32> to vector<8x1xf32>
    %7 = vector.broadcast %6 : vector<8x1xf32> to vector<8x128xf32>
    %8 = arith.subf %3, %7 : vector<8x128xf32>
    %9 = math.exp %8 : vector<8x128xf32>
    %cst_4 = arith.constant dense<0.000000e+00> : vector<8x1xf32>
    %10 = tpu.matmul %9, %1, %cst_4 {dimension_numbers = #tpu.dot_dimension_numbers<[1], [0], [0], [1], [0, 0, 1, 1], [], []>} : vector<8x128xf32>, vector<128x1xf32>, vector<8x1xf32> -> vector<8x1xf32>
    %11 = math.log %10 : vector<8x1xf32>
    %12 = arith.addf %11, %6 : vector<8x1xf32>
    %13 = vector.broadcast %4 : vector<8x1xi32> to vector<8x128xi32>
    %14 = arith.cmpi eq, %0, %13 : vector<8x128xi32>
    %cst_5 = arith.constant 0.000000e+00 : f32
    %15 = vector.broadcast %cst_5 : f32 to vector<8x128xf32>
    %16 = arith.select %14, %3, %15 : vector<8x128xi1>, vector<8x128xf32>
    %cst_6 = arith.constant dense<0.000000e+00> : vector<8x1xf32>
    %17 = tpu.matmul %16, %1, %cst_6 {dimension_numbers = #tpu.dot_dimension_numbers<[1], [0], [0], [1], [0, 0, 1, 1], [], []>} : vector<8x128xf32>, vector<128x1xf32>, vector<8x1xf32> -> vector<8x1xf32>
    %c-100_i32 = arith.constant -100 : i32
    %18 = vector.broadcast %c-100_i32 : i32 to vector<8x1xi32>
    %19 = arith.cmpi ne, %4, %18 : vector<8x1xi32>
    %20 = arith.subf %12, %17 : vector<8x1xf32>
    %cst_7 = arith.constant 0.000000e+00 : f32
    %21 = vector.broadcast %cst_7 : f32 to vector<8x1xf32>
    %22 = arith.select %19, %20, %21 : vector<8x1xi1>, vector<8x1xf32>
    %cst_8 = arith.constant 1.000000e+00 : f32
    %cst_9 = arith.constant 0.000000e+00 : f32
    %23 = vector.broadcast %cst_8 : f32 to vector<8x1xf32>
    %24 = vector.broadcast %cst_9 : f32 to vector<8x1xf32>
    %25 = arith.select %19, %23, %24 : vector<8x1xi1>, vector<8x1xf32>
    %26 = vector.shape_cast %22 : vector<8x1xf32> to vector<1x8x1xf32>
    %cst_10 = arith.constant dense<0.000000e+00> : vector<1xf32>
    %27 = vector.multi_reduction <add>, %26, %cst_10 [1, 2] : vector<1x8x1xf32> to vector<1xf32>
    %28 = vector.shape_cast %27 : vector<1xf32> to vector<1x1x1xf32>
    %29 = vector.extract %28[0, 0, 0] : f32 from vector<1x1x1xf32>
    %30 = vector.shape_cast %25 : vector<8x1xf32> to vector<1x8x1xf32>
    %cst_11 = arith.constant dense<0.000000e+00> : vector<1xf32>
    %31 = vector.multi_reduction <add>, %30, %cst_11 [1, 2] : vector<1x8x1xf32> to vector<1xf32>
    %32 = vector.shape_cast %31 : vector<1xf32> to vector<1x1x1xf32>
    %33 = vector.extract %32[0, 0, 0] : f32 from vector<1x1x1xf32>
    %c0_i32 = arith.constant 0 : i32
    %34 = vector.broadcast %c0_i32 : i32 to vector<8x128xi32>
    %35 = arith.cmpi eq, %2, %34 : vector<8x128xi32>
    %c1_i32 = arith.constant 1 : i32
    %36 = vector.broadcast %c1_i32 : i32 to vector<8x128xi32>
    %37 = arith.cmpi eq, %2, %36 : vector<8x128xi32>
    %cst_12 = arith.constant 0.000000e+00 : f32
    %38 = vector.broadcast %33 : f32 to vector<8x128xf32>
    %39 = vector.broadcast %cst_12 : f32 to vector<8x128xf32>
    %40 = arith.select %37, %38, %39 : vector<8x128xi1>, vector<8x128xf32>
    %41 = vector.broadcast %29 : f32 to vector<8x128xf32>
    %42 = arith.select %35, %41, %40 : vector<8x128xi1>, vector<8x128xf32>
    %c0_13 = arith.constant 0 : index
    %c0_14 = arith.constant 0 : index
    %c0_15 = arith.constant 0 : index
    %43 = vector.load %arg3[%c0_13, %c0_14, %c0_15] : memref<1x8x128xf32, #tpu.memory_space<vmem>>, vector<1x8x128xf32>
    %44 = vector.shape_cast %43 : vector<1x8x128xf32> to vector<8x128xf32>
    %45 = vector.shape_cast %42 : vector<8x128xf32> to vector<1x8x128xf32>
    tpu.vector_store %arg3[%c0_13, %c0_14, %c0_15], %45 {strides = array<i32>} : memref<1x8x128xf32, #tpu.memory_space<vmem>>, vector<1x8x128xf32>,
    return
  }
  func.func @transform_0(%arg0: i32) -> (i32, i32) {
    %c0_i32 = arith.constant 0 : i32
    %c0_i32_0 = arith.constant 0 : i32
    return %arg0, %c0_i32 : i32, i32
  }
  func.func @transform_1(%arg0: i32) -> (i32, i32) {
    %c0_i32 = arith.constant 0 : i32
    %c0_i32_0 = arith.constant 0 : i32
    return %arg0, %c0_i32 : i32, i32
  }
  func.func @transform_2(%arg0: i32) -> (i32, i32, i32) {
    %c0_i32 = arith.constant 0 : i32
    %c0_i32_0 = arith.constant 0 : i32
    %c0_i32_1 = arith.constant 0 : i32
    return %arg0, %c0_i32, %c0_i32_0 : i32, i32, i32
  }
}

</mosaic_0001>

<llo_original>
// kernel: tpu_custom_call.1
$region0: #{tpu_custom_call.1}
  #allocation0 [shape = 'u32[]', space=smem, size = 0x4, offset = 0x4, fixed_abs, tag = 'smem constant byte address 0x4 - core index']
  #allocation1 [shape = 'u32[144,128]{1,0:T(1,128)}', space=vmem, size = 0x12000, scoped, tag = 'internal scratch']
  %s0 = inlined_call_operand.vmem [shape: f32[13,128], index: 0, kind: input, shape index: {}]
  %s1 = inlined_call_operand.vmem [shape: s32[16,1], index: 1, kind: input, shape index: {}]
  %s2 = inlined_call_operand.hbm [shape: f32[2,8,128], index: 2, kind: output, shape index: {}]
  %s3 = sld [smem:[#allocation0]]
  $region41: #{tpu_custom_call.1} parent=0
    _
  %s5 = ssub.s32 1, %s3
  %s6 = scalar_select 0, %s5, %s3
  $region1: #{tpu_custom_call.1} parent=0
    #allocation2 [shape = 'u8[8192]{0}', space=vmem, size = 0x2000, scoped, tag = 'output window, operand 0']
    #allocation3 [shape = 's32[2]{0}', space=sflag, size = 0x8, scoped, tag = 'scoped memory for tpu_custom_call.1']
    %7 = vsyncpa [#allocation3], 0
    %s8 = scalar_lea.sflag [#allocation3], 1
    %9 = vsyncpa %s8, 0
    loop: start=0, step=1, limit=4
    $region2: #{tpu_custom_call.1} parent=1 // loop_pre_header
      _
    $region3: #{tpu_custom_call.1} parent=1 // loop_header
      %s11 = sphi 0, %s15
      %p12 = scmp.ge.s32.totalorder %s11, 4
      %s21 = sphi 0, %s23
      %s24 = sphi 0, %s21
      %s25 = sphi 0, %s24
      %s41 = sphi 0, %s25
      %s47 = sphi 0, %s49
      %s50 = sphi 0, %s47
      %s51 = sphi 0, %s50
      %s67 = sphi 0, %s51
      %s73 = sphi 0, %s75
      %s76 = sphi 0, %s73
      %s77 = sphi 0, %s76
      %s93 = sphi 0, %s77
    $region4: #{tpu_custom_call.1} parent=1 // loop_header_branch
      %14 = sbr.rel (%p12) target = $region8
    $region5: #{tpu_custom_call.1} parent=1 // loop_body
      %s16 = ssub.s32 %s11, 1
      %s17 = ssub.s32 %s11, 2
      %s18 = sadd.s32 %s11, 1
      %s19 = ssub.s32 %s11, %s18
      %p20 = scmp.eq.s32.totalorder %s19, 0
      %s22 = sadd.s32 %s21, 1
      %s23 = scalar_select %p20, %s21, %s22
      %p26 = pneg %p20
      %p27 = scmp.eq.s32.totalorder %s11, 1
      %p28 = por %p26, %p27
      %p29 = scmp.ne.s32.totalorder %s21, %s24
      %p30 = scmp.eq.s32.totalorder %s11, 0
      %p31 = por %p29, %p30
      %p32 = scmp.ne.s32.totalorder %s21, %s24
      %p33 = scmp.eq.s32.totalorder %s16, 1
      %p34 = por %p32, %p33
      %p35 = scmp.ne.s32.totalorder %s24, %s25
      %p36 = scmp.eq.s32.totalorder %s16, 0
      %p37 = por %p35, %p36
      %p38 = scmp.ne.s32.totalorder %s24, %s25
      %p39 = scmp.eq.s32.totalorder %s17, 1
      %p40 = por %p38, %p39
      %p42 = scmp.ne.s32.totalorder %s25, %s41
      %p43 = scmp.eq.s32.totalorder %s17, 0
      %p44 = por %p42, %p43
      %s45 = ssub.s32 %s11, %s18
      %p46 = scmp.eq.s32.totalorder %s45, 0
      %s48 = sadd.s32 %s47, 1
      %s49 = scalar_select %p46, %s47, %s48
      %p52 = pneg %p46
      %p53 = scmp.eq.s32.totalorder %s11, 1
      %p54 = por %p52, %p53
      %p55 = scmp.ne.s32.totalorder %s47, %s50
      %p56 = scmp.eq.s32.totalorder %s11, 0
      %p57 = por %p55, %p56
      %p58 = scmp.ne.s32.totalorder %s47, %s50
      %p59 = scmp.eq.s32.totalorder %s16, 1
      %p60 = por %p58, %p59
      %p61 = scmp.ne.s32.totalorder %s50, %s51
      %p62 = scmp.eq.s32.totalorder %s16, 0
      %p63 = por %p61, %p62
      %p64 = scmp.ne.s32.totalorder %s50, %s51
      %p65 = scmp.eq.s32.totalorder %s17, 1
      %p66 = por %p64, %p65
      %p68 = scmp.ne.s32.totalorder %s51, %s67
      %p69 = scmp.eq.s32.totalorder %s17, 0
      %p70 = por %p68, %p69
      %s71 = ssub.s32 %s11, %s18
      %p72 = scmp.eq.s32.totalorder %s71, 0
      %s74 = sadd.s32 %s73, 1
      %s75 = scalar_select %p72, %s73, %s74
      %p78 = pneg %p72
      %p79 = scmp.eq.s32.totalorder %s11, 1
      %p80 = por %p78, %p79
      %p81 = scmp.ne.s32.totalorder %s73, %s76
      %p82 = scmp.eq.s32.totalorder %s11, 0
      %p83 = por %p81, %p82
      %p84 = scmp.ne.s32.totalorder %s73, %s76
      %p85 = scmp.eq.s32.totalorder %s16, 1
      %p86 = por %p84, %p85
      %p87 = scmp.ne.s32.totalorder %s76, %s77
      %p88 = scmp.eq.s32.totalorder %s16, 0
      %p89 = por %p87, %p88
      %p90 = scmp.ne.s32.totalorder %s76, %s77
      %p91 = scmp.eq.s32.totalorder %s17, 1
      %p92 = por %p90, %p91
      %p94 = scmp.ne.s32.totalorder %s77, %s93
      %p95 = scmp.eq.s32.totalorder %s17, 0
      %p96 = por %p94, %p95
      %p97 = scmp.le.s32.totalorder 1, %s11
      %p98 = scmp.lt.s32.totalorder %s11, 3
      %p99 = pnand %p97, %p98
      %p100 = pneg %p99
      // Predicated region
      $region9: #{tpu_custom_call.1} parent=5 // pred_check
        _
      $region10: #{tpu_custom_call.1} parent=5 // pred_check_branch
        %102 = sbr.rel (%p99) target = $region12
      $region11: #{tpu_custom_call.1} parent=5 // pred_region
        %s103 = ssub.s32 %s11, 1
      $region12: #{tpu_custom_call.1} parent=5 // pred_fallthru
        _
      %p104 = scmp.lt.s32.totalorder %s11, 2
      // Predicated region
      $region13: #{tpu_custom_call.1} parent=5 // pred_check
        %p105 = pneg %p104
      $region14: #{tpu_custom_call.1} parent=5 // pred_check_branch
        %107 = sbr.rel (%p105) target = $region16
      $region15: #{tpu_custom_call.1} parent=5 // pred_region
        // Predicated region
        $region17: #{tpu_custom_call.1} parent=15 // pred_check
          %p108 = pneg %p31
        $region18: #{tpu_custom_call.1} parent=15 // pred_check_branch
          %110 = sbr.rel (%p108) target = $region20
        $region19: #{tpu_custom_call.1} parent=15 // pred_region
          %p111 = scmp.lt.s32.totalorder %s11, 1
          %s112 = scalar_select %p111, %s11, 1
          %s113 = smul.addr %s112, 8
          %s114 = scalar_lea.vmem %s0, %s113
        $region20: #{tpu_custom_call.1} parent=15 // pred_fallthru
          _
        // Predicated region
        $region21: #{tpu_custom_call.1} parent=15 // pred_check
          %p115 = pneg %p57
        $region22: #{tpu_custom_call.1} parent=15 // pred_check_branch
          %117 = sbr.rel (%p115) target = $region24
        $region23: #{tpu_custom_call.1} parent=15 // pred_region
          %p118 = scmp.lt.s32.totalorder %s11, 1
          %s119 = scalar_select %p118, %s11, 1
          %s120 = smul.addr %s119, 8
          %s121 = scalar_lea.vmem %s1, %s120
        $region24: #{tpu_custom_call.1} parent=15 // pred_fallthru
          _
      $region16: #{tpu_custom_call.1} parent=5 // pred_fallthru
        _
      %p122 = scmp.le.s32.totalorder 1, %s11
      %p123 = scmp.lt.s32.totalorder %s11, 3
      %p124 = pnand %p122, %p123
      %p125 = pneg %p124
      // Predicated region
      $region25: #{tpu_custom_call.1} parent=5 // pred_check
        _
      $region26: #{tpu_custom_call.1} parent=5 // pred_check_branch
        %127 = sbr.rel (%p124) target = $region28
      $region27: #{tpu_custom_call.1} parent=5 // pred_region
        %s128 = ssub.s32 %s11, 1
        %p129 = scmp.lt.s32.totalorder %s16, 1
        %s130 = scalar_select %p129, %s16, 1
        %s131 = smul.addr %s130, 8
        %s132 = scalar_lea.vmem %s0, %s131
        %p133 = pneg %p37
        %p134 = pneg %p34
        %p135 = scmp.lt.s32.totalorder %s16, 1
        %s136 = scalar_select %p135, %s16, 1
        %s137 = smul.addr %s136, 8
        %s138 = scalar_lea.vmem %s1, %s137
        %p139 = pneg %p63
        %p140 = pneg %p60
        %p141 = pneg %p89
        %p142 = pneg %p86
        %s143 = sand.u32 %s76, 1
        %s144 = scalar_lea.sflag [#allocation3], %s143
        %s145 = sand.u32 %s76, 1
        %s146 = smul.addr %s145, 8
        %s147 = scalar_lea.vmem [#allocation2], %s146
        %p148 = scmp.lt.s32.totalorder %s16, 1
        %s149 = scalar_select %p148, %s16, 1
        %s150 = smul.addr %s149, 8
        %s151 = scalar_lea.vmem %s0, %s150
        %p152 = scmp.lt.s32.totalorder %s16, 1
        %s153 = scalar_select %p152, %s16, 1
        %s154 = smul.addr %s153, 8
        %s155 = scalar_lea.vmem %s1, %s154
        %v156 = vlaneseq
        %v157 = vand.u32 %v156, 127
        %v158 = vlaneseq
        %v159 = vshrl.u32 %v158, 7
        %v160 = vld [vmem:[%s151] sm:$0xff]
        %v161 = vld [vmem:[%s155] sm:$0xff]
        %162 = vmax.xlane.f32.xlu0 %v160
        %v163 = vpop.xlane.xlu0 %162
        %v164 = vsub.f32 %v160, %v163
        %v165 = vmul.f32 %v164, 1.442695
        %v166 = vpow.pop %v165
        %167 = vmatprep.subr.mxu0 0.0
        %168 = vmatpush1.msra.mxu0 1.0
        %169 = vmatprep.subr.mxu0 0.0
        %170 = vmatpush1.msra.mxu0 1.0
        %171 = vmatprep.subr.mxu0 0.0
        %172 = vmatpush1.msra.mxu0 1.0
        %173 = vmatprep.subr.mxu0 0.0
        %174 = vmatpush1.msra.mxu0 1.0
        %175 = vmatprep.subr.mxu0 0.0
        %176 = vmatpush1.msra.mxu0 1.0
        %177 = vmatprep.subr.mxu0 0.0
        %178 = vmatpush1.msra.mxu0 1.0
        %179 = vmatprep.subr.mxu0 0.0
        %180 = vmatpush1.msra.mxu0 1.0
        %181 = vmatprep.subr.mxu0 0.0
        %182 = vmatpush1.msra.mxu0 1.0
        %183 = vmatprep.subr.mxu0 0.0
        %184 = vmatpush1.msra.mxu0 1.0
        %185 = vmatprep.subr.mxu0 0.0
        %186 = vmatpush1.msra.mxu0 1.0
        %187 = vmatprep.subr.mxu0 0.0
        %188 = vmatpush1.msra.mxu0 1.0
        %189 = vmatprep.subr.mxu0 0.0
        %190 = vmatpush1.msra.mxu0 1.0
        %191 = vmatprep.subr.mxu0 0.0
        %192 = vmatpush1.msra.mxu0 1.0
        %193 = vmatprep.subr.mxu0 0.0
        %194 = vmatpush1.msra.mxu0 1.0
        %195 = vmatprep.subr.mxu0 0.0
        %196 = vmatpush1.msra.mxu0 1.0
        %197 = vmatprep.subr.mxu0 0.0
        %198 = vmatpush1.msra.mxu0 1.0
        %199 = vmatprep.subr.mxu0 0.0
        %200 = vmatpush1.msra.mxu0 0.0
        %201 = vmatprep.subr.mxu0 0.0
        %202 = vmatpush1.msra.mxu0 0.0
        %203 = vmatprep.subr.mxu0 0.0
        %204 = vmatpush1.msra.mxu0 0.0
        %205 = vmatprep.subr.mxu0 0.0
        %206 = vmatpush1.msra.mxu0 0.0
        %207 = vmatprep.subr.mxu0 0.0
        %208 = vmatpush1.msra.mxu0 0.0
        %209 = vmatprep.subr.mxu0 0.0
        %210 = vmatpush1.msra.mxu0 0.0
        %211 = vmatprep.subr.mxu0 0.0
        %212 = vmatpush1.msra.mxu0 0.0
        %213 = vmatprep.subr.mxu0 0.0
        %214 = vmatpush1.msra.mxu0 0.0
        %215 = vmatprep.subr.mxu0 0.0
        %216 = vmatpush1.msra.mxu0 0.0
        %217 = vmatprep.subr.mxu0 0.0
        %218 = vmatpush1.msra.mxu0 0.0
        %219 = vmatprep.subr.mxu0 0.0
        %220 = vmatpush1.msra.mxu0 0.0
        %221 = vmatprep.subr.mxu0 0.0
        %222 = vmatpush1.msra.mxu0 0.0
        %223 = vmatprep.subr.mxu0 0.0
        %224 = vmatpush1.msra.mxu0 0.0
        %225 = vmatprep.subr.mxu0 0.0
        %226 = vmatpush1.msra.mxu0 0.0
        %227 = vmatprep.subr.mxu0 0.0
        %228 = vmatpush1.msra.mxu0 0.0
        %229 = vmatprep.subr.mxu0 0.0
        %230 = vmatpush1.msra.mxu0 0.0
        %231 = vmatprep.mubr.f32.mxu0 0.0
        %232 = vmatmul.mubr.f32.gmra.mrb[0].mxu0 %v166
        %v233 = vpop.f32.mrb[0].mxu0
        %v234 = vadd.f32 0.0, %v233
        %v235 = vpop.f32.mrb[0].mxu0
        %236 = vdwg.mxu0
        %v237 = vlog2.pop %v234
        %v238 = vmul.f32 %v237, 0.6931472
        %v239 = vadd.f32 %v238, %v163
        %240 = vset.pattern.permute.xlu0 0
        %241 = vperm.xlu0 %240, %v161
        %v242 = vpop.permute.xlu0 %241
        %vm243 = vcmp.eq.s32.totalorder %v157, %v242
        %v244 = vsel %vm243, %v160, 0.0
        %245 = vmatprep.subr.mxu0 0.0
        %246 = vmatpush1.msra.mxu0 1.0
        %247 = vmatprep.subr.mxu0 0.0
        %248 = vmatpush1.msra.mxu0 1.0
        %249 = vmatprep.subr.mxu0 0.0
        %250 = vmatpush1.msra.mxu0 1.0
        %251 = vmatprep.subr.mxu0 0.0
        %252 = vmatpush1.msra.mxu0 1.0
        %253 = vmatprep.subr.mxu0 0.0
        %254 = vmatpush1.msra.mxu0 1.0
        %255 = vmatprep.subr.mxu0 0.0
        %256 = vmatpush1.msra.mxu0 1.0
        %257 = vmatprep.subr.mxu0 0.0
        %258 = vmatpush1.msra.mxu0 1.0
        %259 = vmatprep.subr.mxu0 0.0
        %260 = vmatpush1.msra.mxu0 1.0
        %261 = vmatprep.subr.mxu0 0.0
        %262 = vmatpush1.msra.mxu0 1.0
        %263 = vmatprep.subr.mxu0 0.0
        %264 = vmatpush1.msra.mxu0 1.0
        %265 = vmatprep.subr.mxu0 0.0
        %266 = vmatpush1.msra.mxu0 1.0
        %267 = vmatprep.subr.mxu0 0.0
        %268 = vmatpush1.msra.mxu0 1.0
        %269 = vmatprep.subr.mxu0 0.0
        %270 = vmatpush1.msra.mxu0 1.0
        %271 = vmatprep.subr.mxu0 0.0
        %272 = vmatpush1.msra.mxu0 1.0
        %273 = vmatprep.subr.mxu0 0.0
        %274 = vmatpush1.msra.mxu0 1.0
        %275 = vmatprep.subr.mxu0 0.0
        %276 = vmatpush1.msra.mxu0 1.0
        %277 = vmatprep.subr.mxu0 0.0
        %278 = vmatpush1.msra.mxu0 0.0
        %279 = vmatprep.subr.mxu0 0.0
        %280 = vmatpush1.msra.mxu0 0.0
        %281 = vmatprep.subr.mxu0 0.0
        %282 = vmatpush1.msra.mxu0 0.0
        %283 = vmatprep.subr.mxu0 0.0
        %284 = vmatpush1.msra.mxu0 0.0
        %285 = vmatprep.subr.mxu0 0.0
        %286 = vmatpush1.msra.mxu0 0.0
        %287 = vmatprep.subr.mxu0 0.0
        %288 = vmatpush1.msra.mxu0 0.0
        %289 = vmatprep.subr.mxu0 0.0
        %290 = vmatpush1.msra.mxu0 0.0
        %291 = vmatprep.subr.mxu0 0.0
        %292 = vmatpush1.msra.mxu0 0.0
        %293 = vmatprep.subr.mxu0 0.0
        %294 = vmatpush1.msra.mxu0 0.0
        %295 = vmatprep.subr.mxu0 0.0
        %296 = vmatpush1.msra.mxu0 0.0
        %297 = vmatprep.subr.mxu0 0.0
        %298 = vmatpush1.msra.mxu0 0.0
        %299 = vmatprep.subr.mxu0 0.0
        %300 = vmatpush1.msra.mxu0 0.0
        %301 = vmatprep.subr.mxu0 0.0
        %302 = vmatpush1.msra.mxu0 0.0
        %303 = vmatprep.subr.mxu0 0.0
        %304 = vmatpush1.msra.mxu0 0.0
        %305 = vmatprep.subr.mxu0 0.0
        %306 = vmatpush1.msra.mxu0 0.0
        %307 = vmatprep.subr.mxu0 0.0
        %308 = vmatpush1.msra.mxu0 0.0
        %309 = vmatprep.mubr.f32.mxu0 0.0
        %310 = vmatmul.mubr.f32.gmra.mrb[0].mxu0 %v244
        %v311 = vpop.f32.mrb[0].mxu0
        %v312 = vadd.f32 0.0, %v311
        %v313 = vpop.f32.mrb[0].mxu0
        %314 = vdwg.mxu0
        %vm315 = vcmp.ne.s32.totalorder %v161, 4294967196
        %v316 = vsub.f32 %v239, %v312
        %v317 = vsel %vm315, %v316, 0.0
        %v318 = vsel %vm315, 1.0, 0.0
        %vm319 = vcmask 7168
        %v320 = vsel %vm319, %v317, 0.0
        %321 = vadd.xlane.f32.xlu0 %v320
        %v322 = vpop.xlane.xlu0 %321
        %v323 = vrot.slane %v322, 4
        %v324 = vadd.f32 %v322, %v323
        %v325 = vrot.slane %v324, 2
        %v326 = vadd.f32 %v324, %v325
        %v327 = vrot.slane %v326, 1
        %v328 = vadd.f32 %v326, %v327
        %s329 = vtos %v328
        %v330 = vsel %vm319, %v318, 0.0
        %331 = vadd.xlane.f32.xlu0 %v330
        %v332 = vpop.xlane.xlu0 %331
        %v333 = vrot.slane %v332, 4
        %v334 = vadd.f32 %v332, %v333
        %v335 = vrot.slane %v334, 2
        %v336 = vadd.f32 %v334, %v335
        %v337 = vrot.slane %v336, 1
        %v338 = vadd.f32 %v336, %v337
        %s339 = vtos %v338
        %vm340 = vcmp.eq.s32.totalorder %v159, 0
        %vm341 = vcmp.eq.s32.totalorder %v159, 1
        %v342 = vstv %s339
        %v343 = vsel %vm341, %v342, 0.0
        %v344 = vstv %s329
        %v345 = vsel %vm340, %v344, %v343
        %346 = vst [vmem:[%s147] sm:$0xff] %v345
        %s347 = sand.u32 %s76, 1
        %s348 = scalar_lea.sflag [#allocation3], %s347
        %s349 = sand.u32 %s76, 1
        %s350 = smul.addr %s349, 8
        %s351 = scalar_lea.vmem [#allocation2], %s350
        // Predicated region
        $region29: #{tpu_custom_call.1} parent=27 // pred_check
          %p352 = pneg %p86
        $region30: #{tpu_custom_call.1} parent=27 // pred_check_branch
          %354 = sbr.rel (%p352) target = $region32
        $region31: #{tpu_custom_call.1} parent=27 // pred_region
          %s356 = ssub.s32 128, 128
          %357 = vsyncadd %s348, %s356
          %s358 = smul.addr %s16, 128
          %s359 = scalar_lea.hbm %s2, %s358
          %s361 = sshll.u32 %s351, 4
          %s362 = int_to_ptr.vmem [resolvable:$true] %s361
          %364 = dma.vmem_to_hbm [thread:$0]  %s362, 128, %s359, %s348
        $region32: #{tpu_custom_call.1} parent=27 // pred_fallthru
          _
      $region28: #{tpu_custom_call.1} parent=5 // pred_fallthru
        _
      %p365 = scmp.le.s32.totalorder 2, %s11
      // Predicated region
      $region33: #{tpu_custom_call.1} parent=5 // pred_check
        %p366 = pneg %p365
      $region34: #{tpu_custom_call.1} parent=5 // pred_check_branch
        %368 = sbr.rel (%p366) target = $region36
      $region35: #{tpu_custom_call.1} parent=5 // pred_region
        %s369 = ssub.s32 %s11, 2
        // Predicated region
        $region37: #{tpu_custom_call.1} parent=35 // pred_check
          %p370 = pneg %p92
        $region38: #{tpu_custom_call.1} parent=35 // pred_check_branch
          %372 = sbr.rel (%p370) target = $region40
        $region39: #{tpu_custom_call.1} parent=35 // pred_region
          %s373 = sand.u32 %s77, 1
          %s374 = scalar_lea.sflag [#allocation3], %s373
          %s375 = sand.u32 %s77, 1
          %s376 = smul.addr %s375, 8
          %s377 = scalar_lea.vmem [#allocation2], %s376
          %378 = dma.done %s374, 128
        $region40: #{tpu_custom_call.1} parent=35 // pred_fallthru
          _
      $region36: #{tpu_custom_call.1} parent=5 // pred_fallthru
        _
    $region6: #{tpu_custom_call.1} parent=1 // loop_footer
      %s15 = sadd.s32 1, %s11
    $region7: #{tpu_custom_call.1} parent=1 // loop_footer_branch
      %10 = sbr.rel target = $region3
    $region8: #{tpu_custom_call.1} parent=1 // loop_exit
      _
    %379 = vsyncpa [#allocation3], 1
    %s380 = scalar_lea.sflag [#allocation3], 1
    %381 = vsyncpa %s380, 1

</llo_original>
